<compile_context>
chip_gen: v6e
topology: v6e:2x2x1
jax: 0.10.0
libtpu: 0.0.40
codegen_flags: <defaults>
</compile_context>

<pallas_src>
import functools

import jax
import jax.numpy as jnp
import numpy as np
from jax.experimental import pallas as pl
from jax.experimental.pallas import tpu as pltpu


_TARGET_BLOCK_BYTES = 2 * 1024 * 1024     # ~2 MiB per input block (near HBM roofline)
_VMEM_LIMIT_BYTES = 48 * 1024 * 1024      # < v7x 64 MiB physical, > v5e 16 MiB default


def _round_up(x, m):
    return ((x + m - 1) // m) * m


# --------------------- local_size == 1 : pure elementwise path ---------------------

def _lrn_pointwise_kernel(x_ref, o_ref, *, alpha, beta):
    xf = x_ref[...].astype(jnp.float32)                       # all math in f32
    div = xf * xf * jnp.float32(alpha) + jnp.float32(1.0)
    # x / div**beta == x * exp(-beta * log(div)); div >= 1 for alpha >= 0.  EUP work.
    scale = jnp.exp(jnp.float32(-beta) * jnp.log(div))
    o_ref[...] = (xf * scale).astype(o_ref.dtype)


def _lrn_pointwise(x, *, alpha, beta, block_bytes):
    N, C, H, W = x.shape
    R, L = N * C, H * W
    x2 = x.reshape(R, L)                                      # free reshape, lane-dense
    item = x.dtype.itemsize

    # Lane tile: multiple of 128 (or the full dim), sized so an 8-row block hits target.
    ct = _round_up(max(1, block_bytes // (8 * item)), 128)
    if ct >= L:
        ct = L                                                # full dim always legal
    # Row (sublane) tile: multiple of 8 (or the full dim), sized by bytes.
    rt = max(8, _round_up(max(1, block_bytes // (max(ct, 128) * item)), 8))
    if rt >= R:
        rt = R
    # Keep >= ~4 grid steps when possible so v7x's 2 TensorCores can be balanced.
    while rt > 8 and pl.cdiv(R, rt) * pl.cdiv(L, ct) < 4:
        rt = max(8, _round_up(rt // 2, 8))

    kernel = functools.partial(_lrn_pointwise_kernel,
                               alpha=float(alpha), beta=float(beta))
    out2 = pl.pallas_call(
        kernel,
        out_shape=jax.ShapeDtypeStruct((R, L), x.dtype),
        grid_spec=pltpu.PrefetchScalarGridSpec(
            num_scalar_prefetch=0,
            grid=(pl.cdiv(R, rt), pl.cdiv(L, ct)),            # ragged blocks masked
            in_specs=[pl.BlockSpec((rt, ct), lambda i, j: (i, j))],
            out_specs=pl.BlockSpec((rt, ct), lambda i, j: (i, j)),
        ),
        compiler_params=pltpu.CompilerParams(
            dimension_semantics=("parallel", "parallel"),
            vmem_limit_bytes=_VMEM_LIMIT_BYTES),
    )(x2)
    return out2.reshape(N, C, H, W)


# --------------------- local_size > 1 : across-channel window ----------------------

def _lrn_across_kernel(x_ref, o_ref, *, C, pad, local_size, alpha, beta):
    nb, _, t = x_ref.shape
    inv_n = jnp.float32(float(alpha) / float(local_size))
    z = jnp.zeros((pad, t), dtype=jnp.float32)                # hoisted out of the loop
    for i in range(nb):                                       # small static unroll
        xf = x_ref[i].astype(jnp.float32)                     # (C, t)
        xp = jnp.concatenate([z, xf, z], axis=0)              # (C + 2*pad, t)
        # Cross-channel box sum of squares via static sublane slices; the square is
        # fused into each slice so no extra full-size sq buffer stays live.
        acc = xp[0:C, :] * xp[0:C, :]
        for k in range(1, local_size):
            s = xp[k:k + C, :]
            acc = acc + s * s
        div = acc * inv_n + jnp.float32(1.0)
        scale = jnp.exp(jnp.float32(-beta) * jnp.log(div))    # EUP; replaces pow+divide
        o_ref[i] = (xf * scale).astype(o_ref.dtype)


def _lrn_across(x, *, local_size, alpha, beta, block_bytes):
    N, C, H, W = x.shape
    pad = int((local_size - 1.0) / 2)
    L = H * W
    x3 = x.reshape(N, C, L)                                   # free reshape
    item = x.dtype.itemsize

    # Spatial (lane) tile sized by bytes; multiple of 128 or the full dim.
    t = max(128, _round_up(max(1, block_bytes // (C * item)), 128))
    if t >= L:
        t = L
    # When one spatial tile covers a whole image, block several batch elements per step
    # (largest divisor of N within the byte budget, keeping enough grid steps for 2 TCs).
    nb = 1
    if t == L:
        per_img_bytes = C * _round_up(L, 128) * item
        nb_cap = int(min(8, max(1, block_bytes // max(1, per_img_bytes))))
        s_steps = pl.cdiv(L, t)
        min_steps = min(4, N * s_steps)
        for d in range(1, min(N, nb_cap) + 1):
            if N % d == 0 and (N // d) * s_steps >= min_steps:
                nb = d

    kernel = functools.partial(
        _lrn_across_kernel, C=C, pad=pad, local_size=local_size,
        alpha=float(alpha), beta=float(beta))

    out3 = pl.pallas_call(
        kernel,
        out_shape=jax.ShapeDtypeStruct((N, C, L), x.dtype),
        grid_spec=pltpu.PrefetchScalarGridSpec(
            num_scalar_prefetch=0,
            grid=(pl.cdiv(N, nb), pl.cdiv(L, t)),             # ragged spatial block masked
            in_specs=[pl.BlockSpec((nb, C, t), lambda n, s: (n, 0, s))],
            out_specs=pl.BlockSpec((nb, C, t), lambda n, s: (n, 0, s)),
        ),
        compiler_params=pltpu.CompilerParams(
            dimension_semantics=("parallel", "parallel"),
            vmem_limit_bytes=_VMEM_LIMIT_BYTES),
    )(x3)
    return out3.reshape(N, C, H, W)


# ------------------------------------ dispatch --------------------------------------

def lrn_pallas(x, *, local_size=1, alpha=1.0, beta=0.75,
               block_bytes=_TARGET_BLOCK_BYTES):
    """ACROSS_CHANNELS LRN.  x: (N, C, H, W) -> (N, C, H, W)."""
    assert local_size >= 1
    assert alpha >= 0.0, "exp/log fusion assumes div >= 1 (alpha >= 0)"
    if local_size == 1:
        # Module default: no cross-channel window -> pure elementwise, flat layout.
        return _lrn_pointwise(x, alpha=alpha, beta=beta, block_bytes=block_bytes)
    assert local_size % 2 == 1, "odd local_size only (matches AvgPool3d shape contract)"
    return _lrn_across(x, local_size=local_size, alpha=alpha, beta=beta,
                       block_bytes=block_bytes)


# ----------------------------------- reference --------------------------------------

def _lrn_ref(x, *, local_size=1, alpha=1.0, beta=0.75):
    """Pure-numpy reference matching the PyTorch module (ACROSS_CHANNELS=True)."""
    N, C, H, W = x.shape
    pad = int((local_size - 1.0) / 2)
    xd = x.astype(np.float64)
    sq = xd ** 2
    padded = np.zeros((N, C + 2 * pad, H, W), dtype=np.float64)
    padded[:, pad:pad + C] = sq
    acc = np.zeros_like(sq)
    for k in range(local_size):
        acc += padded[:, k:k + C]
    div = (acc / local_size) * alpha + 1.0
    return (xd / (div ** beta)).astype(x.dtype)


if __name__ == "__main__":
    key = jax.random.PRNGKey(0)

    # 1) Module defaults: LRN(local_size=1, alpha=1.0, beta=0.75) -> flat path.
    x = jax.random.normal(key, (2, 4, 16, 16), dtype=jnp.float32)
    out = jax.block_until_ready(lrn_pallas(x, local_size=1, alpha=1.0, beta=0.75))
    ref = _lrn_ref(np.asarray(x), local_size=1, alpha=1.0, beta=0.75)
    np.testing.assert_allclose(np.asarray(out), ref, rtol=1e-5, atol=1e-5)

    # 2) Cross-channel window, spatial dim not a multiple of 128 (full-dim lane block).
    x2 = jax.random.normal(jax.random.PRNGKey(1), (2, 16, 12, 12), dtype=jnp.float32)
    out2 = jax.block_until_ready(lrn_pallas(x2, local_size=5, alpha=1.0, beta=0.75))
    ref2 = _lrn_ref(np.asarray(x2), local_size=5, alpha=1.0, beta=0.75)
    np.testing.assert_allclose(np.asarray(out2), ref2, rtol=1e-5, atol=1e-5)

    # 3) Cross-channel window with batch blocking (nb > 1 per grid step).
    x3 = jax.random.normal(jax.random.PRNGKey(2), (16, 8, 8, 8), dtype=jnp.float32)
    out3 = jax.block_until_ready(lrn_pallas(x3, local_size=3, alpha=2.0, beta=0.75))
    ref3 = _lrn_ref(np.asarray(x3), local_size=3, alpha=2.0, beta=0.75)
    np.testing.assert_allclose(np.asarray(out3), ref3, rtol=1e-5, atol=1e-5)

    # 4) Flat path with forced small blocks -> exercises ragged lane + sublane masking.
    x4 = jax.random.normal(jax.random.PRNGKey(3), (3, 5, 20, 20), dtype=jnp.float32)
    out4 = jax.block_until_ready(
        lrn_pallas(x4, local_size=1, alpha=1.0, beta=0.75, block_bytes=8192))
    ref4 = _lrn_ref(np.asarray(x4), local_size=1, alpha=1.0, beta=0.75)
    np.testing.assert_allclose(np.asarray(out4), ref4, rtol=1e-5, atol=1e-5)

    # 5) Across path with forced small blocks -> ragged last spatial block is masked.
    x5 = jax.random.normal(jax.random.PRNGKey(4), (2, 16, 20, 20), dtype=jnp.float32)
    out5 = jax.block_until_ready(
        lrn_pallas(x5, local_size=3, alpha=1.0, beta=0.75, block_bytes=8192))
    ref5 = _lrn_ref(np.asarray(x5), local_size=3, alpha=1.0, beta=0.75)
    np.testing.assert_allclose(np.asarray(out5), ref5, rtol=1e-5, atol=1e-5)

    print("KERNEL_OK")
</pallas_src>

<mosaic_0001>
module attributes {stable_mosaic.version = 11 : i64} {
  func.func @_lrn_pointwise_kernel(%arg0: i32, %arg1: i32, %arg2: memref<8x256xf32, #tpu.memory_space<vmem>>, %arg3: memref<8x256xf32, #tpu.memory_space<vmem>>) attributes {dimension_semantics = [#tpu.dimension_semantics<parallel>, #tpu.dimension_semantics<parallel>], iteration_bounds = array<i64: 1, 1>, scalar_prefetch = 0 : i64, scratch_operands = 0 : i64, tpu.core_type = #tpu.core_type<tc>, window_params = [{transform_indices = @transform_0, window_bounds = array<i64: 8, 256>}, {transform_indices = @transform_1, window_bounds = array<i64: 8, 256>}]} {
    %c0 = arith.constant 0 : index
    %c0_0 = arith.constant 0 : index
    %0 = vector.load %arg2[%c0, %c0_0] : memref<8x256xf32, #tpu.memory_space<vmem>>, vector<8x256xf32>
    %1 = arith.mulf %0, %0 : vector<8x256xf32>
    %cst = arith.constant 1.000000e+00 : f32
    %2 = vector.broadcast %cst : f32 to vector<8x256xf32>
    %3 = arith.mulf %1, %2 : vector<8x256xf32>
    %cst_1 = arith.constant 1.000000e+00 : f32
    %4 = vector.broadcast %cst_1 : f32 to vector<8x256xf32>
    %5 = arith.addf %3, %4 : vector<8x256xf32>
    %6 = math.log %5 : vector<8x256xf32>
    %cst_2 = arith.constant -7.500000e-01 : f32
    %7 = vector.broadcast %cst_2 : f32 to vector<8x256xf32>
    %8 = arith.mulf %7, %6 : vector<8x256xf32>
    %9 = math.exp %8 : vector<8x256xf32>
    %10 = arith.mulf %0, %9 : vector<8x256xf32>
    %c0_3 = arith.constant 0 : index
    %c0_4 = arith.constant 0 : index
    %11 = vector.load %arg3[%c0_3, %c0_4] : memref<8x256xf32, #tpu.memory_space<vmem>>, vector<8x256xf32>
    tpu.vector_store %arg3[%c0_3, %c0_4], %10 {strides = array<i32>} : memref<8x256xf32, #tpu.memory_space<vmem>>, vector<8x256xf32>,
    return
  }
  func.func @transform_0(%arg0: i32, %arg1: i32) -> (i32, i32) {
    %c0_i32 = arith.constant 0 : i32
    return %arg0, %arg1 : i32, i32
  }
  func.func @transform_1(%arg0: i32, %arg1: i32) -> (i32, i32) {
    %c0_i32 = arith.constant 0 : i32
    return %arg0, %arg1 : i32, i32
  }
}

</mosaic_0001>

<llo_original>
// kernel: tpu_custom_call.1
$region0: #{tpu_custom_call.1}
  #allocation0 [shape = 'u32[]', space=smem, size = 0x4, offset = 0x4, fixed_abs, tag = 'smem constant byte address 0x4 - core index']
  #allocation1 [shape = 'u32[144,128]{1,0:T(1,128)}', space=vmem, size = 0x12000, scoped, tag = 'internal scratch']
  %s0 = inlined_call_operand.hbm [shape: f32[8,256], index: 0, kind: input, shape index: {}]
  %s1 = inlined_call_operand.hbm [shape: f32[8,256], index: 1, kind: output, shape index: {}]
  %s2 = sld [smem:[#allocation0]]
  $region18: #{tpu_custom_call.1} parent=0
    _
  %s4 = ssub.s32 1, %s2
  %s5 = scalar_select 0, %s4, %s2
  $region1: #{tpu_custom_call.1} parent=0
    #allocation2 [shape = 'u8[8192]{0}', space=vmem, size = 0x2000, scoped, tag = 'input window, operand 0, single buffered']
    #allocation3 [shape = 's32[1]{0}', space=sflag, size = 0x4, scoped, tag = 'scoped memory for tpu_custom_call.1']
    #allocation4 [shape = 's32[1]{0}', space=sflag, size = 0x4, scoped, tag = 'scoped memory for tpu_custom_call.1']
    #allocation5 [shape = 'u8[8192]{0}', space=vmem, size = 0x2000, scoped, tag = 'output window, operand 0, single buffered']
    %6 = vsyncpa [#allocation3], 0
    %7 = vsyncpa [#allocation4], 0
    // Predicated region
    $region2: #{tpu_custom_call.1} parent=1 // pred_check
      _
    $region3: #{tpu_custom_call.1} parent=1 // pred_check_branch
      %9 = sbr.rel (0) target = $region5
    $region4: #{tpu_custom_call.1} parent=1 // pred_region
      %s11 = ssub.s32 256, 256
      %12 = vsyncadd [#allocation3], %s11
      %s14 = sshll.u32 [#allocation2], 4
      %s15 = int_to_ptr.vmem [resolvable:$true] %s14
      %17 = dma.hbm_to_vmem [thread:$0]  %s0, 256, %s15, [#allocation3]
    $region5: #{tpu_custom_call.1} parent=1 // pred_fallthru
      _
    // Predicated region
    $region6: #{tpu_custom_call.1} parent=1 // pred_check
      _
    $region7: #{tpu_custom_call.1} parent=1 // pred_check_branch
      %19 = sbr.rel (0) target = $region9
    $region8: #{tpu_custom_call.1} parent=1 // pred_region
      %20 = dma.done [#allocation3], 256
    $region9: #{tpu_custom_call.1} parent=1 // pred_fallthru
      _
    %v21 = vld [vmem:[#allocation2] sm:$0xff]
    %v22 = vld [vmem:[#allocation2 + $0x8] sm:$0xff]
    %v23 = vmul.f32 %v21, %v21
    %v24 = vmul.f32 %v22, %v22
    %v25 = vadd.f32 %v23, 1.0
    %v26 = vadd.f32 %v24, 1.0
    %v27 = vlog2.pop %v25
    %v28 = vmul.f32 %v27, 0.6931472
    %v29 = vlog2.pop %v26
    %v30 = vmul.f32 %v29, 0.6931472
    %v31 = vmul.f32 %v28, -0.75
    %v32 = vmul.f32 %v30, -0.75
    %v33 = vmul.f32 %v31, 1.442695
    %v34 = vpow.pop %v33
    %v35 = vmul.f32 %v32, 1.442695
    %v36 = vpow.pop %v35
    %v37 = vmul.f32 %v21, %v34
    %v38 = vmul.f32 %v22, %v36
    %39 = vst [vmem:[#allocation5] sm:$0xff] %v37
    %40 = vst [vmem:[#allocation5 + $0x8] sm:$0xff] %v38
    // Predicated region
    $region10: #{tpu_custom_call.1} parent=1 // pred_check
      _
    $region11: #{tpu_custom_call.1} parent=1 // pred_check_branch
      %42 = sbr.rel (0) target = $region13
    $region12: #{tpu_custom_call.1} parent=1 // pred_region
      %s44 = ssub.s32 256, 256
      %45 = vsyncadd [#allocation4], %s44
      %s47 = sshll.u32 [#allocation5], 4
      %s48 = int_to_ptr.vmem [resolvable:$true] %s47
      %50 = dma.vmem_to_hbm [thread:$0]  %s48, 256, %s1, [#allocation4]
    $region13: #{tpu_custom_call.1} parent=1 // pred_fallthru
      _
    // Predicated region
    $region14: #{tpu_custom_call.1} parent=1 // pred_check
      _
    $region15: #{tpu_custom_call.1} parent=1 // pred_check_branch
      %52 = sbr.rel (0) target = $region17
    $region16: #{tpu_custom_call.1} parent=1 // pred_region
      %53 = dma.done [#allocation4], 256
    $region17: #{tpu_custom_call.1} parent=1 // pred_fallthru
      _
    %54 = vsyncpa [#allocation3], 1
    %55 = vsyncpa [#allocation4], 1

</llo_original>
